<compile_context>
chip_gen: v6e
topology: v6e:2x2x1
jax: 0.10.0
libtpu: 0.0.40
codegen_flags: <defaults>
</compile_context>

<pallas_src>
import jax
import jax.numpy as jnp
from jax.experimental import pallas as pl
from jax.experimental.pallas import tpu as pltpu


def _value_kernel(xT_ref, w1_ref, b1_ref, w2_ref, b2_ref, o_ref):
    # xT_ref: (Dp, TB)  packed features on sublanes, batch columns on lanes
    # w1_ref: (Hp, Dp)  block-diagonal fc1 weight, resident across grid steps
    # b1_ref: (Hp, 1)   resident
    # w2_ref: (P,  Hp)  block-diagonal fc2 weight, resident
    # b2_ref: (1, 1)    SMEM scalar
    # o_ref:  (P,  TB)  lane-dense output (P packed values per lane column)
    h = jnp.dot(w1_ref[...], xT_ref[...],
                preferred_element_type=jnp.float32)        # MXU: (Hp, TB)
    h = jnp.maximum(h + b1_ref[...], 0.0)                  # bias + ReLU (VPU)
    v = jnp.dot(w2_ref[...], h,
                preferred_element_type=jnp.float32)        # (P, TB) lane-dense
    o_ref[...] = (v + b2_ref[0, 0]).astype(o_ref.dtype)


def _round_up(n: int, m: int) -> int:
    return ((n + m - 1) // m) * m


_TB_MAX = 32768  # lane-tile cap (review #1); sweepable in the 8K..64K range


@jax.jit
def value_network_forward(x, w1, b1, w2, b2):
    """Pallas forward pass matching ValueNetwork.forward semantics.

    x:  (..., state_dim) float32; 1-D inputs get a batch dim prepended,
        higher-rank inputs are flattened per-row (x.view(B, -1)).
    w1: (hidden, state_dim)   -- PyTorch fc1.weight layout
    b1: (hidden,)             -- fc1.bias
    w2: (1, hidden)           -- fc2.weight
    b2: (1,)                  -- fc2.bias
    returns: (B,) float32     -- fc2 output squeezed on the last dim
    """
    if x.ndim == 1:
        x = x[None, :]
    x = x.reshape(x.shape[0], -1)                      # x.view(B, -1)
    B, D = x.shape
    H = w1.shape[0]

    # --- sublane packing factor (review #4): P batch elements per column ---
    P = 8 // D if (0 < D < 8 and 8 % D == 0) else 1
    Dp = _round_up(D * P, 8)
    Hb = H * P
    Hp = max(8, _round_up(Hb, 8))

    # --- lane tiling (reviews #1 / #3) ---
    Bc = -(-B // P)                                    # packed columns needed
    Bc128 = _round_up(Bc, 128)
    # Large tiles, but keep >= 2 grid steps when there is enough work so the
    # "parallel" grid axis can be sharded across v7x's two TensorCores.
    TB = min(_TB_MAX, _round_up(-(-Bc128 // 2), 128)) if Bc128 > 128 else 128
    Bp = _round_up(Bc128, TB)
    n_tiles = Bp // TB

    f32 = jnp.float32
    # Packed feature-major input: column j = concat(x[j*P], ..., x[j*P+P-1]).
    x_rows = jnp.pad(x.astype(f32), ((0, Bc * P - B), (0, 0)))        # (Bc*P, D)
    xT = jnp.pad(x_rows.reshape(Bc, P * D).T,
                 ((0, Dp - P * D), (0, Bp - Bc)))                     # (Dp, Bp)

    eye = jnp.eye(P, dtype=f32)
    w1p = jnp.pad(jnp.kron(eye, w1.astype(f32)),
                  ((0, Hp - Hb), (0, Dp - P * D)))                    # (Hp, Dp)
    b1p = jnp.pad(jnp.tile(b1.astype(f32), P).reshape(Hb, 1),
                  ((0, Hp - Hb), (0, 0)))                             # (Hp, 1)
    w2p = jnp.pad(jnp.kron(eye, w2.astype(f32).reshape(1, H)),
                  ((0, 0), (0, Hp - Hb)))                             # (P, Hp)
    b2s = b2.astype(f32).reshape(1, 1)

    flops = 2 * Bp * Dp * Hp + 2 * Bp * Hp + 2 * Bp * Hp * P
    bytes_accessed = 4 * (Dp * Bp + Hp * Dp + Hp + P * Hp + 1 + P * Bp)

    out = pl.pallas_call(
        _value_kernel,
        out_shape=jax.ShapeDtypeStruct((P, Bp), f32),
        grid=(n_tiles,),
        in_specs=[
            pl.BlockSpec((Dp, TB), lambda i: (0, i)),            # xT: tiled batch
            pl.BlockSpec((Hp, Dp), lambda i: (0, 0)),            # W1': resident
            pl.BlockSpec((Hp, 1), lambda i: (0, 0)),             # b1': resident
            pl.BlockSpec((P, Hp), lambda i: (0, 0)),             # W2': resident
            pl.BlockSpec(memory_space=pltpu.MemorySpace.SMEM),   # b2: SMEM scalar
        ],
        out_specs=pl.BlockSpec((P, TB), lambda i: (0, i)),       # lane-dense out
        compiler_params=pltpu.CompilerParams(
            dimension_semantics=("parallel",),       # shard grid steps across TCs
            vmem_limit_bytes=32 * 1024 * 1024,       # review #2: v5e 16 MiB default
        ),
        cost_estimate=pl.CostEstimate(
            flops=flops, transcendentals=0, bytes_accessed=bytes_accessed),
    )(xT, w1p, b1p, w2p, b2s)

    # Un-interleave packed columns back to batch order and drop padding.
    return out[:, :Bc].T.reshape(-1)[:B]


def init_params(key, state_dim, hidden_size):
    """Deterministic init mimicking nn.Linear defaults, in PyTorch layout."""
    k1, k2, k3, k4 = jax.random.split(key, 4)
    bound1 = 1.0 / jnp.sqrt(jnp.float32(state_dim))
    bound2 = 1.0 / jnp.sqrt(jnp.float32(hidden_size))
    w1 = jax.random.uniform(k1, (hidden_size, state_dim), jnp.float32,
                            -bound1, bound1)
    b1 = jax.random.uniform(k2, (hidden_size,), jnp.float32, -bound1, bound1)
    w2 = jax.random.uniform(k3, (1, hidden_size), jnp.float32, -bound2, bound2)
    b2 = jax.random.uniform(k4, (1,), jnp.float32, -bound2, bound2)
    return w1, b1, w2, b2


def _ref_forward(x, w1, b1, w2, b2):
    h = jnp.maximum(x @ w1.T + b1, 0.0)
    return (h @ w2.T + b2)[:, 0]


if __name__ == "__main__":
    key = jax.random.PRNGKey(0)
    k_param, k_x, k_x2 = jax.random.split(key, 3)

    # state_space.shape == (4,)  ->  state_dim = 4 ; module default hidden = 128
    state_dim = 4
    hidden_size = 128
    batch = 2

    w1, b1, w2, b2 = init_params(k_param, state_dim, hidden_size)
    x = jax.random.normal(k_x, (batch, state_dim), jnp.float32)

    values = value_network_forward(x, w1, b1, w2, b2)
    jax.block_until_ready(values)

    ref = _ref_forward(x, w1, b1, w2, b2)
    assert values.shape == (batch,)
    assert jnp.allclose(values, ref, atol=1e-5, rtol=1e-5)

    # 1-D input path (x.dim() == 1 in the PyTorch module).
    v1 = value_network_forward(x[0], w1, b1, w2, b2)
    jax.block_until_ready(v1)
    assert v1.shape == (1,)
    assert jnp.allclose(v1[0], ref[0], atol=1e-5, rtol=1e-5)

    # Odd batch exercises the packed-column padding / un-interleave path.
    xb = jax.random.normal(k_x2, (129, state_dim), jnp.float32)
    vb = value_network_forward(xb, w1, b1, w2, b2)
    jax.block_until_ready(vb)
    refb = _ref_forward(xb, w1, b1, w2, b2)
    assert vb.shape == (129,)
    assert jnp.allclose(vb, refb, atol=1e-4, rtol=1e-4)

    print("KERNEL_OK")
</pallas_src>

<mosaic_0001>
module attributes {stable_mosaic.version = 11 : i64} {
  func.func @_value_kernel(%arg0: i32, %arg1: memref<8x128xf32, #tpu.memory_space<vmem>>, %arg2: memref<256x8xf32, #tpu.memory_space<vmem>>, %arg3: memref<256x1xf32, #tpu.memory_space<vmem>>, %arg4: memref<2x256xf32, #tpu.memory_space<vmem>>, %arg5: memref<1x1xf32, #tpu.memory_space<smem>>, %arg6: memref<2x128xf32, #tpu.memory_space<vmem>>) attributes {dimension_semantics = [#tpu.dimension_semantics<parallel>], iteration_bounds = array<i64: 1>, scalar_prefetch = 0 : i64, scratch_operands = 0 : i64, tpu.core_type = #tpu.core_type<tc>, window_params = [{transform_indices = @transform_0, window_bounds = array<i64: 8, 128>}, {pipeline_mode = #tpu.pipeline_mode<synchronous>, transform_indices = @transform_1, window_bounds = array<i64: 256, 8>}, {pipeline_mode = #tpu.pipeline_mode<synchronous>, transform_indices = @transform_2, window_bounds = array<i64: 256, 1>}, {pipeline_mode = #tpu.pipeline_mode<synchronous>, transform_indices = @transform_3, window_bounds = array<i64: 2, 256>}, {transform_indices = @transform_4, window_bounds = array<i64: 1, 1>}, {transform_indices = @transform_5, window_bounds = array<i64: 2, 128>}]} {
    %c0 = arith.constant 0 : index
    %c0_0 = arith.constant 0 : index
    %0 = vector.load %arg2[%c0, %c0_0] : memref<256x8xf32, #tpu.memory_space<vmem>>, vector<256x8xf32>
    %c0_1 = arith.constant 0 : index
    %c0_2 = arith.constant 0 : index
    %1 = vector.load %arg1[%c0_1, %c0_2] : memref<8x128xf32, #tpu.memory_space<vmem>>, vector<8x128xf32>
    %cst = arith.constant dense<0.000000e+00> : vector<256x128xf32>
    %2 = tpu.matmul %0, %1, %cst {dimension_numbers = #tpu.dot_dimension_numbers<[1], [0], [0], [1], [0, 0, 1, 1], [], []>} : vector<256x8xf32>, vector<8x128xf32>, vector<256x128xf32> -> vector<256x128xf32>
    %c0_3 = arith.constant 0 : index
    %c0_4 = arith.constant 0 : index
    %3 = vector.load %arg3[%c0_3, %c0_4] : memref<256x1xf32, #tpu.memory_space<vmem>>, vector<256x1xf32>
    %4 = vector.broadcast %3 : vector<256x1xf32> to vector<256x128xf32>
    %5 = arith.addf %2, %4 : vector<256x128xf32>
    %cst_5 = arith.constant 0.000000e+00 : f32
    %6 = vector.broadcast %cst_5 : f32 to vector<256x128xf32>
    %7 = arith.maximumf %5, %6 : vector<256x128xf32>
    %c0_6 = arith.constant 0 : index
    %c0_7 = arith.constant 0 : index
    %8 = vector.load %arg4[%c0_6, %c0_7] : memref<2x256xf32, #tpu.memory_space<vmem>>, vector<2x256xf32>
    %cst_8 = arith.constant dense<0.000000e+00> : vector<2x128xf32>
    %9 = tpu.matmul %8, %7, %cst_8 {dimension_numbers = #tpu.dot_dimension_numbers<[1], [0], [0], [1], [0, 0, 1, 1], [], []>} : vector<2x256xf32>, vector<256x128xf32>, vector<2x128xf32> -> vector<2x128xf32>
    %c0_9 = arith.constant 0 : index
    %c0_10 = arith.constant 0 : index
    %10 = memref.load %arg5[%c0_9, %c0_10] : memref<1x1xf32, #tpu.memory_space<smem>>
    %11 = vector.broadcast %10 : f32 to vector<2x128xf32>
    %12 = arith.addf %9, %11 : vector<2x128xf32>
    %c0_11 = arith.constant 0 : index
    %c0_12 = arith.constant 0 : index
    %13 = vector.load %arg6[%c0_11, %c0_12] : memref<2x128xf32, #tpu.memory_space<vmem>>, vector<2x128xf32>
    tpu.vector_store %arg6[%c0_11, %c0_12], %12 {strides = array<i32>} : memref<2x128xf32, #tpu.memory_space<vmem>>, vector<2x128xf32>,
    return
  }
  func.func @transform_0(%arg0: i32) -> (i32, i32) {
    %c0_i32 = arith.constant 0 : i32
    %c0_i32_0 = arith.constant 0 : i32
    return %c0_i32, %arg0 : i32, i32
  }
  func.func @transform_1(%arg0: i32) -> (i32, i32) {
    %c0_i32 = arith.constant 0 : i32
    %c0_i32_0 = arith.constant 0 : i32
    %c0_i32_1 = arith.constant 0 : i32
    return %c0_i32, %c0_i32_0 : i32, i32
  }
  func.func @transform_2(%arg0: i32) -> (i32, i32) {
    %c0_i32 = arith.constant 0 : i32
    %c0_i32_0 = arith.constant 0 : i32
    %c0_i32_1 = arith.constant 0 : i32
    return %c0_i32, %c0_i32_0 : i32, i32
  }
  func.func @transform_3(%arg0: i32) -> (i32, i32) {
    %c0_i32 = arith.constant 0 : i32
    %c0_i32_0 = arith.constant 0 : i32
    %c0_i32_1 = arith.constant 0 : i32
    return %c0_i32, %c0_i32_0 : i32, i32
  }
  func.func @transform_4(%arg0: i32) -> (i32, i32) {
    %c0_i32 = arith.constant 0 : i32
    %c0_i32_0 = arith.constant 0 : i32
    %c0_i32_1 = arith.constant 0 : i32
    return %c0_i32, %c0_i32_0 : i32, i32
  }
  func.func @transform_5(%arg0: i32) -> (i32, i32) {
    %c0_i32 = arith.constant 0 : i32
    %c0_i32_0 = arith.constant 0 : i32
    return %c0_i32, %arg0 : i32, i32
  }
}

</mosaic_0001>

<llo_original>
// kernel: tile.8
$region0: #{tile.8}
  #allocation0 [shape = 's32[1]{0}', space=sflag, size = 0x4, scoped, tag = 'scoped memory for tile.8']
  %s0 = inlined_call_operand.vmem [shape: f32[128], index: 0, kind: input, shape index: {}]
  %s1 = inlined_call_operand.vmem [shape: f32[2,128], index: 1, kind: output, shape index: {}]
  // Predicated region
  $region2: #{tile.8} parent=0 // pred_check
    _
  $region3: #{tile.8} parent=0 // pred_check_branch
    %3 = sbr.rel (0) target = $region5
  $region4: #{tile.8} parent=0 // pred_region
    _
  $region5: #{tile.8} parent=0 // pred_fallthru
    _
  %v4 = vld [vmem:[%s0] ss:$0 sm:$0xff]
  %5 = vst [vmem:[%s1] sm:$0x3] %v4

// kernel: value_network_forward.1
$region0: #{value_network_forward.1}
  #allocation0 [shape = 'u32[]', space=smem, size = 0x4, offset = 0x4, fixed_abs, tag = 'smem constant byte address 0x4 - core index']
  #allocation1 [shape = 'u32[144,128]{1,0:T(1,128)}', space=vmem, size = 0x12000, scoped, tag = 'internal scratch']
  #allocation2 [shape = 'f32[1,1]{1,0:T(1,128)S(6)}', space=smem, size = 0x200, scoped, tag = 'scoped memory for value_network_forward.1']
  %s0 = inlined_call_operand.vmem [shape: f32[8,128], index: 0, kind: input, shape index: {}]
  %s1 = inlined_call_operand.vmem [shape: f32[256,8], index: 1, kind: input, shape index: {}]
  %s2 = inlined_call_operand.vmem [shape: f32[256,1], index: 2, kind: input, shape index: {}]
  %s3 = inlined_call_operand.vmem [shape: f32[2,256], index: 3, kind: input, shape index: {}]
  %s4 = inlined_call_operand.<no memory space> [shape: f32[1,1], index: 4, kind: input, shape index: {}]
  %s5 = inlined_call_operand.vmem [shape: f32[2,128], index: 5, kind: output, shape index: {}]
  %s6 = sld [smem:[#allocation0]]
  $region30: #{value_network_forward.1} parent=0
    _
  %s8 = ssub.s32 1, %s6
  %s9 = scalar_select 0, %s8, %s6
  %10 = sst [smem:[#allocation2]] %s4
  // Predicated region
  $region2: #{value_network_forward.1} parent=0 // pred_check
    _
  $region3: #{value_network_forward.1} parent=0 // pred_check_branch
    %12 = sbr.rel (0) target = $region5
  $region4: #{value_network_forward.1} parent=0 // pred_region
    _
  $region5: #{value_network_forward.1} parent=0 // pred_fallthru
    _
  // Predicated region
  $region6: #{value_network_forward.1} parent=0 // pred_check
    _
  $region7: #{value_network_forward.1} parent=0 // pred_check_branch
    %14 = sbr.rel (0) target = $region9
  $region8: #{value_network_forward.1} parent=0 // pred_region
    _
  $region9: #{value_network_forward.1} parent=0 // pred_fallthru
    _
  // Predicated region
  $region10: #{value_network_forward.1} parent=0 // pred_check
    _
  $region11: #{value_network_forward.1} parent=0 // pred_check_branch
    %16 = sbr.rel (0) target = $region13
  $region12: #{value_network_forward.1} parent=0 // pred_region
    _
  $region13: #{value_network_forward.1} parent=0 // pred_fallthru
    _
  // Predicated region
  $region14: #{value_network_forward.1} parent=0 // pred_check
    _
  $region15: #{value_network_forward.1} parent=0 // pred_check_branch
    %18 = sbr.rel (0) target = $region17
  $region16: #{value_network_forward.1} parent=0 // pred_region
    _
  $region17: #{value_network_forward.1} parent=0 // pred_fallthru
    _
  // Predicated region
  $region18: #{value_network_forward.1} parent=0 // pred_check
    _
  $region19: #{value_network_forward.1} parent=0 // pred_check_branch
    %20 = sbr.rel (0) target = $region21
  $region20: #{value_network_forward.1} parent=0 // pred_region
    _
  $region21: #{value_network_forward.1} parent=0 // pred_fallthru
    _
  %v21 = vld [vmem:[%s1] sm:$0xff]
  %v22 = vld [vmem:[%s1 + $0x8] sm:$0xff]
  %v23 = vld [vmem:[%s1 + $0x10] sm:$0xff]
  %v24 = vld [vmem:[%s1 + $0x18] sm:$0xff]
  %v25 = vld [vmem:[%s1 + $0x20] sm:$0xff]
  %v26 = vld [vmem:[%s1 + $0x28] sm:$0xff]
  %v27 = vld [vmem:[%s1 + $0x30] sm:$0xff]
  %v28 = vld [vmem:[%s1 + $0x38] sm:$0xff]
  %v29 = vld [vmem:[%s1 + $0x40] sm:$0xff]
  %v30 = vld [vmem:[%s1 + $0x48] sm:$0xff]
  %v31 = vld [vmem:[%s1 + $0x50] sm:$0xff]
  %v32 = vld [vmem:[%s1 + $0x58] sm:$0xff]
  %v33 = vld [vmem:[%s1 + $0x60] sm:$0xff]
  %v34 = vld [vmem:[%s1 + $0x68] sm:$0xff]
  %v35 = vld [vmem:[%s1 + $0x70] sm:$0xff]
  %v36 = vld [vmem:[%s1 + $0x78] sm:$0xff]
  %v37 = vld [vmem:[%s1 + $0x80] sm:$0xff]
  %v38 = vld [vmem:[%s1 + $0x88] sm:$0xff]
  %v39 = vld [vmem:[%s1 + $0x90] sm:$0xff]
  %v40 = vld [vmem:[%s1 + $0x98] sm:$0xff]
  %v41 = vld [vmem:[%s1 + $0xa0] sm:$0xff]
  %v42 = vld [vmem:[%s1 + $0xa8] sm:$0xff]
  %v43 = vld [vmem:[%s1 + $0xb0] sm:$0xff]
  %v44 = vld [vmem:[%s1 + $0xb8] sm:$0xff]
  %v45 = vld [vmem:[%s1 + $0xc0] sm:$0xff]
  %v46 = vld [vmem:[%s1 + $0xc8] sm:$0xff]
  %v47 = vld [vmem:[%s1 + $0xd0] sm:$0xff]
  %v48 = vld [vmem:[%s1 + $0xd8] sm:$0xff]
  %v49 = vld [vmem:[%s1 + $0xe0] sm:$0xff]
  %v50 = vld [vmem:[%s1 + $0xe8] sm:$0xff]
  %v51 = vld [vmem:[%s1 + $0xf0] sm:$0xff]
  %v52 = vld [vmem:[%s1 + $0xf8] sm:$0xff]
  %v53 = vld [vmem:[%s0] sm:$0xff]
  %v54 = vld [vmem:[%s2] sm:$0xff]
  %v55 = vld [vmem:[%s2 + $0x8] sm:$0xff]
  %v56 = vld [vmem:[%s2 + $0x10] sm:$0xff]
  %v57 = vld [vmem:[%s2 + $0x18] sm:$0xff]
  %v58 = vld [vmem:[%s2 + $0x20] sm:$0xff]
  %v59 = vld [vmem:[%s2 + $0x28] sm:$0xff]
  %v60 = vld [vmem:[%s2 + $0x30] sm:$0xff]
  %v61 = vld [vmem:[%s2 + $0x38] sm:$0xff]
  %v62 = vld [vmem:[%s2 + $0x40] sm:$0xff]
  %v63 = vld [vmem:[%s2 + $0x48] sm:$0xff]
  %v64 = vld [vmem:[%s2 + $0x50] sm:$0xff]
  %v65 = vld [vmem:[%s2 + $0x58] sm:$0xff]
  %v66 = vld [vmem:[%s2 + $0x60] sm:$0xff]
  %v67 = vld [vmem:[%s2 + $0x68] sm:$0xff]
  %v68 = vld [vmem:[%s2 + $0x70] sm:$0xff]
  %v69 = vld [vmem:[%s2 + $0x78] sm:$0xff]
  %v70 = vld [vmem:[%s2 + $0x80] sm:$0xff]
  %v71 = vld [vmem:[%s2 + $0x88] sm:$0xff]
  %v72 = vld [vmem:[%s2 + $0x90] sm:$0xff]
  %v73 = vld [vmem:[%s2 + $0x98] sm:$0xff]
  %v74 = vld [vmem:[%s2 + $0xa0] sm:$0xff]
  %v75 = vld [vmem:[%s2 + $0xa8] sm:$0xff]
  %v76 = vld [vmem:[%s2 + $0xb0] sm:$0xff]
  %v77 = vld [vmem:[%s2 + $0xb8] sm:$0xff]
  %v78 = vld [vmem:[%s2 + $0xc0] sm:$0xff]
  %v79 = vld [vmem:[%s2 + $0xc8] sm:$0xff]
  %v80 = vld [vmem:[%s2 + $0xd0] sm:$0xff]
  %v81 = vld [vmem:[%s2 + $0xd8] sm:$0xff]
  %v82 = vld [vmem:[%s2 + $0xe0] sm:$0xff]
  %v83 = vld [vmem:[%s2 + $0xe8] sm:$0xff]
  %v84 = vld [vmem:[%s2 + $0xf0] sm:$0xff]
  %v85 = vld [vmem:[%s2 + $0xf8] sm:$0xff]
  %87 = vset.pattern.permute.xlu0 0
  %88 = vperm.xlu0 %87, %v54
  %v89 = vpop.permute.xlu0 %88
  %92 = vset.pattern.permute.xlu0 0
  %93 = vperm.xlu0 %92, %v55
  %v94 = vpop.permute.xlu0 %93
  %97 = vset.pattern.permute.xlu0 0
  %98 = vperm.xlu0 %97, %v56
  %v99 = vpop.permute.xlu0 %98
  %102 = vset.pattern.permute.xlu0 0
  %103 = vperm.xlu0 %102, %v57
  %v104 = vpop.permute.xlu0 %103
  %107 = vset.pattern.permute.xlu0 0
  %108 = vperm.xlu0 %107, %v58
  %v109 = vpop.permute.xlu0 %108
  %112 = vset.pattern.permute.xlu0 0
  %113 = vperm.xlu0 %112, %v59
  %v114 = vpop.permute.xlu0 %113
  %117 = vset.pattern.permute.xlu0 0
  %118 = vperm.xlu0 %117, %v60
  %v119 = vpop.permute.xlu0 %118
  %122 = vset.pattern.permute.xlu0 0
  %123 = vperm.xlu0 %122, %v61
  %v124 = vpop.permute.xlu0 %123
  %127 = vset.pattern.permute.xlu0 0
  %128 = vperm.xlu0 %127, %v62
  %v129 = vpop.permute.xlu0 %128
  %132 = vset.pattern.permute.xlu0 0
  %133 = vperm.xlu0 %132, %v63
  %v134 = vpop.permute.xlu0 %133
  %137 = vset.pattern.permute.xlu0 0
  %138 = vperm.xlu0 %137, %v64
  %v139 = vpop.permute.xlu0 %138
  %142 = vset.pattern.permute.xlu0 0
  %143 = vperm.xlu0 %142, %v65
  %v144 = vpop.permute.xlu0 %143
  %147 = vset.pattern.permute.xlu0 0
  %148 = vperm.xlu0 %147, %v66
  %v149 = vpop.permute.xlu0 %148
  %152 = vset.pattern.permute.xlu0 0
  %153 = vperm.xlu0 %152, %v67
  %v154 = vpop.permute.xlu0 %153
  %157 = vset.pattern.permute.xlu0 0
  %158 = vperm.xlu0 %157, %v68
  %v159 = vpop.permute.xlu0 %158
  %162 = vset.pattern.permute.xlu0 0
  %163 = vperm.xlu0 %162, %v69
  %v164 = vpop.permute.xlu0 %163
  %167 = vset.pattern.permute.xlu0 0
  %168 = vperm.xlu0 %167, %v70
  %v169 = vpop.permute.xlu0 %168
  %172 = vset.pattern.permute.xlu0 0
  %173 = vperm.xlu0 %172, %v71
  %v174 = vpop.permute.xlu0 %173
  %177 = vset.pattern.permute.xlu0 0
  %178 = vperm.xlu0 %177, %v72
  %v179 = vpop.permute.xlu0 %178
  %182 = vset.pattern.permute.xlu0 0
  %183 = vperm.xlu0 %182, %v73
  %v184 = vpop.permute.xlu0 %183
  %187 = vset.pattern.permute.xlu0 0
  %188 = vperm.xlu0 %187, %v74
  %v189 = vpop.permute.xlu0 %188
  %192 = vset.pattern.permute.xlu0 0
  %193 = vperm.xlu0 %192, %v75
  %v194 = vpop.permute.xlu0 %193
  %197 = vset.pattern.permute.xlu0 0
  %198 = vperm.xlu0 %197, %v76
  %v199 = vpop.permute.xlu0 %198
  %202 = vset.pattern.permute.xlu0 0
  %203 = vperm.xlu0 %202, %v77
  %v204 = vpop.permute.xlu0 %203
  %207 = vset.pattern.permute.xlu0 0
  %208 = vperm.xlu0 %207, %v78
  %v209 = vpop.permute.xlu0 %208
  %212 = vset.pattern.permute.xlu0 0
  %213 = vperm.xlu0 %212, %v79
  %v214 = vpop.permute.xlu0 %213
  %217 = vset.pattern.permute.xlu0 0
  %218 = vperm.xlu0 %217, %v80
  %v219 = vpop.permute.xlu0 %218
  %222 = vset.pattern.permute.xlu0 0
  %223 = vperm.xlu0 %222, %v81
  %v224 = vpop.permute.xlu0 %223
  %227 = vset.pattern.permute.xlu0 0
  %228 = vperm.xlu0 %227, %v82
  %v229 = vpop.permute.xlu0 %228
  %232 = vset.pattern.permute.xlu0 0
  %233 = vperm.xlu0 %232, %v83
  %v234 = vpop.permute.xlu0 %233
  %237 = vset.pattern.permute.xlu0 0
  %238 = vperm.xlu0 %237, %v84
  %v239 = vpop.permute.xlu0 %238
  %242 = vset.pattern.permute.xlu0 0
  %243 = vperm.xlu0 %242, %v85
  %v244 = vpop.permute.xlu0 %243
  %vm246 = vcmask 64512
  %v248 = vsel %vm246, %v21, 0
  %v251 = vsel %vm246, %v22, 0
  %v254 = vsel %vm246, %v23, 0
  %v257 = vsel %vm246, %v24, 0
  %v260 = vsel %vm246, %v25, 0
  %v263 = vsel %vm246, %v26, 0
  %v266 = vsel %vm246, %v27, 0
  %v269 = vsel %vm246, %v28, 0
  %v272 = vsel %vm246, %v29, 0
  %v275 = vsel %vm246, %v30, 0
  %v278 = vsel %vm246, %v31, 0
  %v281 = vsel %vm246, %v32, 0
  %v284 = vsel %vm246, %v33, 0
  %v287 = vsel %vm246, %v34, 0
  %v290 = vsel %vm246, %v35, 0
  %v293 = vsel %vm246, %v36, 0
  %v296 = vsel %vm246, %v37, 0
  %v299 = vsel %vm246, %v38, 0
  %v302 = vsel %vm246, %v39, 0
  %v305 = vsel %vm246, %v40, 0
  %v308 = vsel %vm246, %v41, 0
  %v311 = vsel %vm246, %v42, 0
  %v314 = vsel %vm246, %v43, 0
  %v317 = vsel %vm246, %v44, 0
  %v320 = vsel %vm246, %v45, 0
  %v323 = vsel %vm246, %v46, 0
  %v326 = vsel %vm246, %v47, 0
  %v329 = vsel %vm246, %v48, 0
  %v332 = vsel %vm246, %v49, 0
  %v335 = vsel %vm246, %v50, 0
  %v338 = vsel %vm246, %v51, 0
  %v341 = vsel %vm246, %v52, 0
  %343 = vmatprep.subr.mxu0 0.0
  %344 = vmatpush1.msra.mxu0 0.0
  %345 = vmatprep.subr.mxu0 0.0
  %346 = vmatpush1.msra.mxu0 0.0
  %347 = vmatprep.subr.mxu0 0.0
  %348 = vmatpush1.msra.mxu0 0.0
  %349 = vmatprep.subr.mxu0 0.0
  %350 = vmatpush1.msra.mxu0 0.0
  %351 = vmatprep.subr.mxu0 0.0
  %352 = vmatpush1.msra.mxu0 0.0
  %353 = vmatprep.subr.mxu0 0.0
  %354 = vmatpush1.msra.mxu0 0.0
  %355 = vmatprep.subr.mxu0 0.0
  %356 = vmatpush1.msra.mxu0 0.0
  %357 = vmatprep.subr.mxu0 0.0
  %358 = vmatpush1.msra.mxu0 0.0
  %359 = vmatprep.subr.mxu0 0.0
  %360 = vmatpush1.msra.mxu0 0.0
  %361 = vmatprep.subr.mxu0 0.0
  %362 = vmatpush1.msra.mxu0 0.0
  %363 = vmatprep.subr.mxu0 0.0
  %364 = vmatpush1.msra.mxu0 0.0
  %365 = vmatprep.subr.mxu0 0.0
  %366 = vmatpush1.msra.mxu0 0.0
  %367 = vmatprep.subr.mxu0 0.0
  %368 = vmatpush1.msra.mxu0 0.0
  %369 = vmatprep.subr.mxu0 0.0
  %370 = vmatpush1.msra.mxu0 0.0
  %371 = vmatprep.subr.mxu0 0.0
  %372 = vmatpush1.msra.mxu0 0.0
  %373 = vmatprep.subr.mxu0 0.0
  %374 = vmatpush1.msra.mxu0 %v53
  %375 = vmatprep.subr.mxu0 0.0
  %376 = vmatpush2.msra.mxu0 0.0
  %377 = vmatprep.subr.mxu0 0.0
  %378 = vmatpush2.msra.mxu0 0.0
  %379 = vmatprep.subr.mxu0 0.0
  %380 = vmatpush2.msra.mxu0 0.0
  %381 = vmatprep.subr.mxu0 0.0
  %382 = vmatpush2.msra.mxu0 0.0
  %383 = vmatprep.subr.mxu0 0.0
  %384 = vmatpush2.msra.mxu0 0.0
  %385 = vmatprep.subr.mxu0 0.0
  %386 = vmatpush2.msra.mxu0 0.0
  %387 = vmatprep.subr.mxu0 0.0
  %388 = vmatpush2.msra.mxu0 0.0
  %389 = vmatprep.subr.mxu0 0.0
  %390 = vmatpush2.msra.mxu0 0.0
  %391 = vmatprep.subr.mxu0 0.0
  %392 = vmatpush2.msra.mxu0 0.0
  %393 = vmatprep.subr.mxu0 0.0
  %394 = vmatpush2.msra.mxu0 0.0
  %395 = vmatprep.subr.mxu0 0.0
  %396 = vmatpush2.msra.mxu0 0.0
  %397 = vmatprep.subr.mxu0 0.0
  %398 = vmatpush2.msra.mxu0 0.0
  %399 = vmatprep.subr.mxu0 0.0
  %400 = vmatpush2.msra.mxu0 0.0
  %401 = vmatprep.subr.mxu0 0.0
  %402 = vmatpush2.msra.mxu0 0.0
  %403 = vmatprep.subr.mxu0 0.0
  %404 = vmatpush2.msra.mxu0 0.0
  %405 = vmatprep.subr.mxu0 0.0
  %406 = vmatpush2.msra.mxu0 0.0
  %407 = vmatprep.mubr.f32.mxu0 0.0
  %408 = vmatmul.mubr.f32.gmra.mxu0 %v248
  %v409 = vpop.f32.mrf.mxu0
  %v410 = vadd.f32 %v89, %v409
  %v411 = vpop.f32.mrf.mxu0
  %412 = vmatprep.mubr.f32.mxu0 0.0
  %413 = vmatmul.mubr.f32.gmra.mxu0 %v251
  %v414 = vpop.f32.mrf.mxu0
  %v415 = vadd.f32 %v94, %v414
  %v416 = vpop.f32.mrf.mxu0
  %417 = vmatprep.mubr.f32.mxu0 0.0
  %418 = vmatmul.mubr.f32.gmra.mxu0 %v254
  %v419 = vpop.f32.mrf.mxu0
  %v420 = vadd.f32 %v99, %v419
  %v421 = vpop.f32.mrf.mxu0
  %422 = vmatprep.mubr.f32.mxu0 0.0
  %423 = vmatmul.mubr.f32.gmra.mxu0 %v257
  %v424 = vpop.f32.mrf.mxu0
  %v425 = vadd.f32 %v104, %v424
  %v426 = vpop.f32.mrf.mxu0
  %427 = vmatprep.mubr.f32.mxu0 0.0
  %428 = vmatmul.mubr.f32.gmra.mxu0 %v260
  %v429 = vpop.f32.mrf.mxu0
  %v430 = vadd.f32 %v109, %v429
  %v431 = vpop.f32.mrf.mxu0
  %432 = vmatprep.mubr.f32.mxu0 0.0
  %433 = vmatmul.mubr.f32.gmra.mxu0 %v263
  %v434 = vpop.f32.mrf.mxu0
  %v435 = vadd.f32 %v114, %v434
  %v436 = vpop.f32.mrf.mxu0
  %437 = vmatprep.mubr.f32.mxu0 0.0
  %438 = vmatmul.mubr.f32.gmra.mxu0 %v266
  %v439 = vpop.f32.mrf.mxu0
  %v440 = vadd.f32 %v119, %v439
  %v441 = vpop.f32.mrf.mxu0
  %442 = vmatprep.mubr.f32.mxu0 0.0
  %443 = vmatmul.mubr.f32.gmra.mxu0 %v269
  %v444 = vpop.f32.mrf.mxu0
  %v445 = vadd.f32 %v124, %v444
  %v446 = vpop.f32.mrf.mxu0
  %447 = vmatprep.mubr.f32.mxu0 0.0
  %448 = vmatmul.mubr.f32.gmra.mxu0 %v272
  %v449 = vpop.f32.mrf.mxu0
  %v450 = vadd.f32 %v129, %v449
  %v451 = vpop.f32.mrf.mxu0
  %452 = vmatprep.mubr.f32.mxu0 0.0
  %453 = vmatmul.mubr.f32.gmra.mxu0 %v275
  %v454 = vpop.f32.mrf.mxu0
  %v455 = vadd.f32 %v134, %v454
  %v456 = vpop.f32.mrf.mxu0
  %457 = vmatprep.mubr.f32.mxu0 0.0
  %458 = vmatmul.mubr.f32.gmra.mxu0 %v278
  %v459 = vpop.f32.mrf.mxu0
  %v460 = vadd.f32 %v139, %v459
  %v461 = vpop.f32.mrf.mxu0
  %462 = vmatprep.mubr.f32.mxu0 0.0
  %463 = vmatmul.mubr.f32.gmra.mxu0 %v281
  %v464 = vpop.f32.mrf.mxu0
  %v465 = vadd.f32 %v144, %v464
  %v466 = vpop.f32.mrf.mxu0
  %467 = vmatprep.mubr.f32.mxu0 0.0
  %468 = vmatmul.mubr.f32.gmra.mxu0 %v284
  %v469 = vpop.f32.mrf.mxu0
  %v470 = vadd.f32 %v149, %v469
  %v471 = vpop.f32.mrf.mxu0
  %472 = vmatprep.mubr.f32.mxu0 0.0
  %473 = vmatmul.mubr.f32.gmra.mxu0 %v287
  %v474 = vpop.f32.mrf.mxu0
  %v475 = vadd.f32 %v154, %v474
  %v476 = vpop.f32.mrf.mxu0
  %477 = vmatprep.mubr.f32.mxu0 0.0
  %478 = vmatmul.mubr.f32.gmra.mxu0 %v290
  %v479 = vpop.f32.mrf.mxu0
  %v480 = vadd.f32 %v159, %v479
  %v481 = vpop.f32.mrf.mxu0
  %482 = vmatprep.mubr.f32.mxu0 0.0
  %483 = vmatmul.mubr.f32.gmra.mxu0 %v293
  %v484 = vpop.f32.mrf.mxu0
  %v485 = vadd.f32 %v164, %v484
  %v486 = vpop.f32.mrf.mxu0
  %487 = vmatprep.mubr.f32.mxu0 0.0
  %488 = vmatmul.mubr.f32.gmra.mxu0 %v296
  %v489 = vpop.f32.mrf.mxu0
  %v490 = vadd.f32 %v169, %v489
  %v491 = vpop.f32.mrf.mxu0
  %492 = vmatprep.mubr.f32.mxu0 0.0
  %493 = vmatmul.mubr.f32.gmra.mxu0 %v299
  %v494 = vpop.f32.mrf.mxu0
  %v495 = vadd.f32 %v174, %v494
  %v496 = vpop.f32.mrf.mxu0
  %497 = vmatprep.mubr.f32.mxu0 0.0
  %498 = vmatmul.mubr.f32.gmra.mxu0 %v302
  %v499 = vpop.f32.mrf.mxu0
  %v500 = vadd.f32 %v179, %v499
  %v501 = vpop.f32.mrf.mxu0
  %502 = vmatprep.mubr.f32.mxu0 0.0
  %503 = vmatmul.mubr.f32.gmra.mxu0 %v305
  %v504 = vpop.f32.mrf.mxu0
  %v505 = vadd.f32 %v184, %v504
  %v506 = vpop.f32.mrf.mxu0
  %507 = vmatprep.mubr.f32.mxu0 0.0
  %508 = vmatmul.mubr.f32.gmra.mxu0 %v308
  %v509 = vpop.f32.mrf.mxu0
  %v510 = vadd.f32 %v189, %v509
  %v511 = vpop.f32.mrf.mxu0
  %512 = vmatprep.mubr.f32.mxu0 0.0
  %513 = vmatmul.mubr.f32.gmra.mxu0 %v311
  %v514 = vpop.f32.mrf.mxu0
  %v515 = vadd.f32 %v194, %v514
  %v516 = vpop.f32.mrf.mxu0
  %517 = vmatprep.mubr.f32.mxu0 0.0
  %518 = vmatmul.mubr.f32.gmra.mxu0 %v314
  %v519 = vpop.f32.mrf.mxu0
  %v520 = vadd.f32 %v199, %v519
  %v521 = vpop.f32.mrf.mxu0
  %522 = vmatprep.mubr.f32.mxu0 0.0
  %523 = vmatmul.mubr.f32.gmra.mxu0 %v317
  %v524 = vpop.f32.mrf.mxu0
  %v525 = vadd.f32 %v204, %v524
  %v526 = vpop.f32.mrf.mxu0
  %527 = vmatprep.mubr.f32.mxu0 0.0
  %528 = vmatmul.mubr.f32.gmra.mxu0 %v320
  %v529 = vpop.f32.mrf.mxu0
  %v530 = vadd.f32 %v209, %v529
  %v531 = vpop.f32.mrf.mxu0
  %532 = vmatprep.mubr.f32.mxu0 0.0
  %533 = vmatmul.mubr.f32.gmra.mxu0 %v323
  %v534 = vpop.f32.mrf.mxu0
  %v535 = vadd.f32 %v214, %v534
  %v536 = vpop.f32.mrf.mxu0
  %537 = vmatprep.mubr.f32.mxu0 0.0
  %538 = vmatmul.mubr.f32.gmra.mxu0 %v326
  %v539 = vpop.f32.mrf.mxu0
  %v540 = vadd.f32 %v219, %v539
  %v541 = vpop.f32.mrf.mxu0
  %542 = vmatprep.mubr.f32.mxu0 0.0
  %543 = vmatmul.mubr.f32.gmra.mxu0 %v329
  %v544 = vpop.f32.mrf.mxu0
  %v545 = vadd.f32 %v224, %v544
  %v546 = vpop.f32.mrf.mxu0
  %547 = vmatprep.mubr.f32.mxu0 0.0
  %548 = vmatmul.mubr.f32.gmra.mxu0 %v332
  %v549 = vpop.f32.mrf.mxu0
  %v550 = vadd.f32 %v229, %v549
  %v551 = vpop.f32.mrf.mxu0
  %552 = vmatprep.mubr.f32.mxu0 0.0
  %553 = vmatmul.mubr.f32.gmra.mxu0 %v335
  %v554 = vpop.f32.mrf.mxu0
  %v555 = vadd.f32 %v234, %v554
  %v556 = vpop.f32.mrf.mxu0
  %557 = vmatprep.mubr.f32.mxu0 0.0
  %558 = vmatmul.mubr.f32.gmra.mxu0 %v338
  %v559 = vpop.f32.mrf.mxu0
  %v560 = vadd.f32 %v239, %v559
  %v561 = vpop.f32.mrf.mxu0
  %562 = vmatprep.mubr.f32.mxu0 0.0
  %563 = vmatmul.mubr.f32.gmra.mxu0 %v341
  %v564 = vpop.f32.mrf.mxu0
  %v565 = vadd.f32 %v244, %v564
  %v566 = vpop.f32.mrf.mxu0
  %567 = vdwg.mxu0
  %v568 = vmax.f32 %v410, 0.0
  %v569 = vmax.f32 %v415, 0.0
  %v570 = vmax.f32 %v420, 0.0
  %v571 = vmax.f32 %v425, 0.0
  %v572 = vmax.f32 %v430, 0.0
  %v573 = vmax.f32 %v435, 0.0
  %v574 = vmax.f32 %v440, 0.0
  %v575 = vmax.f32 %v445, 0.0
  %v576 = vmax.f32 %v450, 0.0
  %v577 = vmax.f32 %v455, 0.0
  %v578 = vmax.f32 %v460, 0.0
  %v579 = vmax.f32 %v465, 0.0
  %v580 = vmax.f32 %v470, 0.0
  %v581 = vmax.f32 %v475, 0.0
  %v582 = vmax.f32 %v480, 0.0
  %v583 = vmax.f32 %v485, 0.0
  %v584 = vmax.f32 %v490, 0.0
  %v585 = vmax.f32 %v495, 0.0
  %v586 = vmax.f32 %v500, 0.0
  %v587 = vmax.f32 %v505, 0.0
  %v588 = vmax.f32 %v510, 0.0
  %v589 = vmax.f32 %v515, 0.0
  %v590 = vmax.f32 %v520, 0.0
  %v591 = vmax.f32 %v525, 0.0
  %v592 = vmax.f32 %v530, 0.0
  %v593 = vmax.f32 %v535, 0.0
  %v594 = vmax.f32 %v540, 0.0
  %v595 = vmax.f32 %v545, 0.0
  %v596 = vmax.f32 %v550, 0.0
  %v597 = vmax.f32 %v555, 0.0
  %v598 = vmax.f32 %v560, 0.0
  %v599 = vmax.f32 %v565, 0.0
  %v600 = vld [vmem:[%s3] sm:$0xf]
  %s601 = sld [smem:[#allocation2]]
  %v602 = vstv %s601
  %v605 = vunpack.c.l.s4 1983009808
  %v606 = vunpack.c.0.s8 %v605
  %v607 = vlaneseq
  %v608 = vshrl.u32 %v607, 7
  %v609 = vsub.s32 %v606, %v608
  %v610 = vrot.slane %v600, %v609
  %v611 = vcombine.high %v610, %v610
  %614 = vmatprep.subr.mxu0 0.0
  %615 = vmatpush1.msra.mxu0 %v583
  %616 = vmatprep.subr.mxu0 0.0
  %617 = vmatpush1.msra.mxu0 %v582
  %618 = vmatprep.subr.mxu0 0.0
  %619 = vmatpush1.msra.mxu0 %v581
  %620 = vmatprep.subr.mxu0 0.0
  %621 = vmatpush1.msra.mxu0 %v580
  %622 = vmatprep.subr.mxu0 0.0
  %623 = vmatpush1.msra.mxu0 %v579
  %624 = vmatprep.subr.mxu0 0.0
  %625 = vmatpush1.msra.mxu0 %v578
  %626 = vmatprep.subr.mxu0 0.0
  %627 = vmatpush1.msra.mxu0 %v577
  %628 = vmatprep.subr.mxu0 0.0
  %629 = vmatpush1.msra.mxu0 %v576
  %630 = vmatprep.subr.mxu0 0.0
  %631 = vmatpush1.msra.mxu0 %v575
  %632 = vmatprep.subr.mxu0 0.0
  %633 = vmatpush1.msra.mxu0 %v574
  %634 = vmatprep.subr.mxu0 0.0
  %635 = vmatpush1.msra.mxu0 %v573
  %636 = vmatprep.subr.mxu0 0.0
  %637 = vmatpush1.msra.mxu0 %v572
  %638 = vmatprep.subr.mxu0 0.0
  %639 = vmatpush1.msra.mxu0 %v571
  %640 = vmatprep.subr.mxu0 0.0
  %641 = vmatpush1.msra.mxu0 %v570
  %642 = vmatprep.subr.mxu0 0.0
  %643 = vmatpush1.msra.mxu0 %v569
  %644 = vmatprep.subr.mxu0 0.0
  %645 = vmatpush1.msra.mxu0 %v568
  %646 = vmatprep.subr.mxu0 0.0
  %647 = vmatpush2.msra.mxu0 %v599
  %648 = vmatprep.subr.mxu0 0.0
  %649 = vmatpush2.msra.mxu0 %v598
  %650 = vmatprep.subr.mxu0 0.0
  %651 = vmatpush2.msra.mxu0 %v597
  %652 = vmatprep.subr.mxu0 0.0
  %653 = vmatpush2.msra.mxu0 %v596
  %654 = vmatprep.subr.mxu0 0.0
  %655 = vmatpush2.msra.mxu0 %v595
  %656 = vmatprep.subr.mxu0 0.0
  %657 = vmatpush2.msra.mxu0 %v594
  %658 = vmatprep.subr.mxu0 0.0
  %659 = vmatpush2.msra.mxu0 %v593
  %660 = vmatprep.subr.mxu0 0.0
  %661 = vmatpush2.msra.mxu0 %v592
  %662 = vmatprep.subr.mxu0 0.0
  %663 = vmatpush2.msra.mxu0 %v591
  %664 = vmatprep.subr.mxu0 0.0
  %665 = vmatpush2.msra.mxu0 %v590
  %666 = vmatprep.subr.mxu0 0.0
  %667 = vmatpush2.msra.mxu0 %v589
  %668 = vmatprep.subr.mxu0 0.0
  %669 = vmatpush2.msra.mxu0 %v588
  %670 = vmatprep.subr.mxu0 0.0
  %671 = vmatpush2.msra.mxu0 %v587
  %672 = vmatprep.subr.mxu0 0.0
  %673 = vmatpush2.msra.mxu0 %v586
  %674 = vmatprep.subr.mxu0 0.0
  %675 = vmatpush2.msra.mxu0 %v585
  %676 = vmatprep.subr.mxu0 0.0
  %677 = vmatpush2.msra.mxu0 %v584
  %678 = vmatprep.mubr.f32.mxu0 %v611
  %679 = vmatmul.mubr.f32.gmra.mxu0 %v610
  %v680 = vpop.f32.mrf.mxu0
  %v681 = vadd.f32 %v602, %v680
  %v682 = vpop.f32.mrf.mxu0
  %683 = vdwg.mxu0
  %684 = vst [vmem:[%s5] sm:$0x3] %v681
  // Predicated region
  $region22: #{value_network_forward.1} parent=0 // pred_check
    _
  $region23: #{value_network_forward.1} parent=0 // pred_check_branch
    %686 = sbr.rel (0) target = $region25
  $region24: #{value_network_forward.1} parent=0 // pred_region
    _
  $region25: #{value_network_forward.1} parent=0 // pred_fallthru
    _
  // Predicated region
  $region26: #{value_network_forward.1} parent=0 // pred_check
    _
  $region27: #{value_network_forward.1} parent=0 // pred_check_branch
    %688 = sbr.rel (0) target = $region29
  $region28: #{value_network_forward.1} parent=0 // pred_region
    _
  $region29: #{value_network_forward.1} parent=0 // pred_fallthru
    _

</llo_original>
